<compile_context>
chip_gen: v7x
topology: tpu7x:2x2x1
jax: 0.10.0
libtpu: 0.0.40
codegen_flags: <defaults>
</compile_context>

<pallas_src>
import functools

import jax
import jax.numpy as jnp
from jax.experimental import pallas as pl
from jax.experimental.pallas import tpu as pltpu


def _stn_kernel(idx_ref, wts_ref, feat_ref, out_ref, *, H_in, W_in, tile_n):
    """One grid step == one (batch, N-tile).

    idx_ref  : (1, 1, TN) VMEM int32  -- base corner index (y0*W+x0) mod HW_in
    wts_ref  : (1, 4, TN) VMEM f32    -- validity-masked bilinear weights
    feat_ref : (1, C, HW_in) VMEM     -- per-batch feature slab
    out_ref  : (1, C, TN) VMEM        -- output column block
    """
    HW_in = H_in * W_in

    # Row-index iota along the flattened-pixel (sublane) axis, built once per
    # N tile and reused for all four corners.
    jj = jax.lax.broadcasted_iota(jnp.int32, (HW_in, tile_n), 0)
    k00 = idx_ref[0]                                   # (1, TN) int32
    base = (jj == k00).astype(jnp.float32)             # one-hot @ (x0, y0)

    # Remaining corner one-hots via XLU sublane rolls (circular wrap-around is
    # harmless: those weights are already masked to zero in the wrapper).
    e10 = pltpu.roll(base, 1, 0)                       # (x1, y0): +1
    e01 = pltpu.roll(base, W_in, 0)                    # (x0, y1): +W
    e11 = pltpu.roll(base, W_in + 1, 0)                # (x1, y1): +W+1

    w = wts_ref[0]                                     # (4, TN)
    s_mat = (base * w[0:1, :] + e10 * w[1:2, :] +
             e01 * w[2:3, :] + e11 * w[3:4, :])        # (HW_in, TN)

    out = jnp.dot(feat_ref[0], s_mat,
                  preferred_element_type=jnp.float32)  # (C, TN)
    out_ref[0] = out.astype(out_ref.dtype)


def _pick_tile_n(N, HW_in):
    """Largest lane-dense N-tile whose (HW_in, TN) f32 temporaries stay within
    a conservative VMEM budget; never wider than N rounded up to 128."""
    budget = 12 * 2**20                     # ~5 concurrent (HW_in, TN) f32 temps
    tile_n = 512
    while tile_n > 128 and 5 * HW_in * tile_n * 4 > budget:
        tile_n //= 2
    n128 = ((N + 127) // 128) * 128
    return max(128, min(tile_n, n128))


def spatial_transformer_pallas(feat, pm_matrix, frustum, *, bev_feat_h,
                               bev_feat_w, org_img_w, org_img_h, tile_n=None):
    """feat: (B, C, H_in, W_in) f32, pm_matrix: (B, 3, 3) f32,
    frustum: (3, bev_feat_h*bev_feat_w) f32 -> (B, C, bev_feat_h, bev_feat_w)."""
    B, C, H_in, W_in = feat.shape
    N = bev_feat_h * bev_feat_w
    HW_in = H_in * W_in
    feat_flat = feat.reshape(B, C, HW_in).astype(jnp.float32)

    if tile_n is None:
        tile_n = _pick_tile_n(N, HW_in)

    # ---- projection + bilinear corner setup in XLA (tiny (B, N) tensors) ----
    pm_pts = jnp.einsum('bij,jn->bin', pm_matrix, frustum)       # (B, 3, N)
    denom = pm_pts[:, 2, :] + 1e-8
    gx = pm_pts[:, 0, :] / denom
    gy = pm_pts[:, 1, :] / denom
    gx = (gx / (org_img_w - 1.0) - 0.5) * 2.0
    gy = (gy / (org_img_h - 1.0) - 0.5) * 2.0
    # F.grid_sample, align_corners=False: unnormalize to input pixel coords
    ix = ((gx + 1.0) * W_in - 1.0) * 0.5
    iy = ((gy + 1.0) * H_in - 1.0) * 0.5

    x0f = jnp.floor(ix)
    y0f = jnp.floor(iy)
    wx1 = ix - x0f
    wx0 = 1.0 - wx1
    wy1 = iy - y0f
    wy0 = 1.0 - wy1
    x1f = x0f + 1.0
    y1f = y0f + 1.0

    def masked(w, xc, yc):
        valid = ((xc >= 0.0) & (xc <= W_in - 1.0) &
                 (yc >= 0.0) & (yc <= H_in - 1.0))
        return jnp.where(valid, w, 0.0)

    w00 = masked(wx0 * wy0, x0f, y0f)
    w10 = masked(wx1 * wy0, x1f, y0f)
    w01 = masked(wx0 * wy1, x0f, y1f)
    w11 = masked(wx1 * wy1, x1f, y1f)
    wts = jnp.stack([w00, w10, w01, w11], axis=1).astype(jnp.float32)  # (B,4,N)

    # Base corner index for the roll trick.  Clip before the int cast so huge /
    # non-finite coords never overflow int32; mod HW_in so the x0=-1 / y0=-1
    # boundary cases still roll onto the correct in-bounds corner pixel.
    x0i = jnp.clip(x0f, -2.0, W_in + 1.0).astype(jnp.int32)
    y0i = jnp.clip(y0f, -2.0, H_in + 1.0).astype(jnp.int32)
    k00 = jnp.mod(y0i * W_in + x0i, HW_in).astype(jnp.int32)           # (B, N)
    idx = k00[:, None, :]                                              # (B,1,N)

    # Pad N to a lane-dense multiple of tile_n (padded weights are zero, so the
    # padded output columns are zero and get sliced off).
    n_pad = ((N + tile_n - 1) // tile_n) * tile_n
    if n_pad != N:
        pad = n_pad - N
        idx = jnp.pad(idx, ((0, 0), (0, 0), (0, pad)))
        wts = jnp.pad(wts, ((0, 0), (0, 0), (0, pad)))
    n_tiles = n_pad // tile_n

    kernel = functools.partial(_stn_kernel, H_in=H_in, W_in=W_in, tile_n=tile_n)

    # Explicit VMEM budget (double-buffered blocks + s_mat intermediates),
    # capped well below v7x's 64 MiB physical VMEM.
    est = (2 * C * HW_in * 4          # feat slab, double-buffered
           + 2 * C * tile_n * 4       # output block, double-buffered
           + 2 * 5 * tile_n * 4       # idx + weight blocks, double-buffered
           + 6 * HW_in * tile_n * 4)  # iota / one-hots / S temporaries
    vmem_limit = int(min(48 * 2**20, max(2 * est, 16 * 2**20)))

    out_flat = pl.pallas_call(
        kernel,
        out_shape=jax.ShapeDtypeStruct((B, C, n_pad), jnp.float32),
        grid_spec=pltpu.PrefetchScalarGridSpec(
            num_scalar_prefetch=0,
            grid=(B, n_tiles),
            in_specs=[
                # per-(batch, N-tile) base corner indices
                pl.BlockSpec((1, 1, tile_n), lambda b, n: (b, 0, n)),
                # per-(batch, N-tile) masked bilinear weights
                pl.BlockSpec((1, 4, tile_n), lambda b, n: (b, 0, n)),
                # per-batch feature slab (block index constant across the N
                # axis -> stays resident in VMEM, re-DMA'd only per batch)
                pl.BlockSpec((1, C, HW_in), lambda b, n: (b, 0, 0)),
            ],
            out_specs=pl.BlockSpec((1, C, tile_n), lambda b, n: (b, 0, n)),
        ),
        compiler_params=pltpu.CompilerParams(
            dimension_semantics=("parallel", "parallel"),
            vmem_limit_bytes=vmem_limit),
    )(idx, wts, feat_flat)

    out_flat = out_flat[:, :, :N]
    return out_flat.reshape(B, C, bev_feat_h, bev_feat_w)


def make_frustum(bev_feat_h, bev_feat_w, bev_feat_ratio):
    xs = jnp.broadcast_to(
        jnp.arange(bev_feat_w, dtype=jnp.float32)[None, :] * bev_feat_ratio,
        (bev_feat_h, bev_feat_w))
    ys = jnp.broadcast_to(
        jnp.arange(bev_feat_h, dtype=jnp.float32)[:, None] * bev_feat_ratio,
        (bev_feat_h, bev_feat_w))
    ds = jnp.ones((bev_feat_h, bev_feat_w), jnp.float32)
    return jnp.stack([xs, ys, ds], 0).reshape(3, -1)


def spatial_transformer_ref(feat, pm_matrix, frustum, *, bev_feat_h,
                            bev_feat_w, org_img_w, org_img_h):
    """Pure-JAX reference mirroring the PyTorch forward (grid_sample,
    bilinear, align_corners=False, padding_mode='zeros')."""
    B, C, H, W = feat.shape
    pm_pts = jnp.einsum('bij,jn->bin', pm_matrix, frustum)       # (B, 3, N)
    denom = pm_pts[:, 2, :] + 1e-8
    gx = pm_pts[:, 0, :] / denom
    gy = pm_pts[:, 1, :] / denom
    gx = (gx / (org_img_w - 1.0) - 0.5) * 2.0
    gy = (gy / (org_img_h - 1.0) - 0.5) * 2.0
    ix = ((gx + 1.0) * W - 1.0) / 2.0
    iy = ((gy + 1.0) * H - 1.0) / 2.0
    x0 = jnp.floor(ix)
    y0 = jnp.floor(iy)
    x1 = x0 + 1
    y1 = y0 + 1
    wx1 = ix - x0
    wx0 = 1.0 - wx1
    wy1 = iy - y0
    wy0 = 1.0 - wy1

    def corner(xc, yc, w):
        valid = (xc >= 0) & (xc < W) & (yc >= 0) & (yc < H)
        xi = jnp.clip(xc, 0, W - 1).astype(jnp.int32)
        yi = jnp.clip(yc, 0, H - 1).astype(jnp.int32)
        v = jax.vmap(lambda f, yy, xx: f[:, yy, xx])(feat, yi, xi)  # (B, C, N)
        return v * (w * valid.astype(jnp.float32))[:, None, :]

    out = (corner(x0, y0, wx0 * wy0) + corner(x1, y0, wx1 * wy0) +
           corner(x0, y1, wx0 * wy1) + corner(x1, y1, wx1 * wy1))
    return out.reshape(B, C, bev_feat_h, bev_feat_w)


if __name__ == "__main__":
    # Module config (small, consistent with SpatialTransformer.__init__)
    B, C = 2, 4
    feat_height, feat_width = 16, 16
    x_bound = [-16.0, 16.0, 0.5]
    y_bound = [-16.0, 16.0, 0.5]
    bev_feat_ratio = 4
    bev_width = int((x_bound[1] - x_bound[0]) / x_bound[2])      # 64
    bev_height = int((y_bound[1] - y_bound[0]) / y_bound[2])     # 64
    bev_feat_w = bev_width // bev_feat_ratio                     # 16
    bev_feat_h = bev_height // bev_feat_ratio                    # 16
    org_img_width, org_img_height = 64, 64

    key = jax.random.PRNGKey(0)
    k_feat, k_pm = jax.random.split(key)

    feat = jax.random.normal(k_feat, (B, C, feat_height, feat_width),
                             dtype=jnp.float32)

    # Deterministic pm_matrix: scaled identity mapping frustum coords onto the
    # original image range, plus a small per-batch perturbation.
    base = jnp.array(
        [[(org_img_width - 1) / ((bev_feat_w - 1) * bev_feat_ratio), 0.0, 0.0],
         [0.0, (org_img_height - 1) / ((bev_feat_h - 1) * bev_feat_ratio), 0.0],
         [0.0, 0.0, 1.0]], dtype=jnp.float32)
    pert_scale = jnp.array([[0.02], [0.02], [0.002]], dtype=jnp.float32)
    pm_matrix = base[None] + (jax.random.normal(k_pm, (B, 3, 3),
                                                dtype=jnp.float32) * pert_scale)

    frustum = make_frustum(bev_feat_h, bev_feat_w, bev_feat_ratio)

    bev = spatial_transformer_pallas(
        feat, pm_matrix, frustum,
        bev_feat_h=bev_feat_h, bev_feat_w=bev_feat_w,
        org_img_w=org_img_width, org_img_h=org_img_height)
    bev = jax.block_until_ready(bev)

    ref = spatial_transformer_ref(
        feat, pm_matrix, frustum,
        bev_feat_h=bev_feat_h, bev_feat_w=bev_feat_w,
        org_img_w=org_img_width, org_img_h=org_img_height)

    assert bev.shape == (B, C, bev_feat_h, bev_feat_w)
    assert jnp.allclose(bev, ref, atol=1e-4, rtol=1e-4), \
        float(jnp.max(jnp.abs(bev - ref)))
    print("KERNEL_OK")
</pallas_src>

<mosaic_0001>
module attributes {stable_mosaic.version = 11 : i64} {
  func.func @_stn_kernel(%arg0: i32, %arg1: i32, %arg2: memref<1x1x256xi32, #tpu.memory_space<vmem>>, %arg3: memref<1x4x256xf32, #tpu.memory_space<vmem>>, %arg4: memref<1x4x256xf32, #tpu.memory_space<vmem>>, %arg5: memref<1x4x256xf32, #tpu.memory_space<vmem>>) attributes {dimension_semantics = [#tpu.dimension_semantics<parallel>, #tpu.dimension_semantics<parallel>], iteration_bounds = array<i64: 2, 1>, scalar_prefetch = 0 : i64, scratch_operands = 0 : i64, tpu.core_type = #tpu.core_type<tc>, window_params = [{transform_indices = @transform_0, window_bounds = array<i64: 1, 1, 256>}, {transform_indices = @transform_1, window_bounds = array<i64: 1, 4, 256>}, {transform_indices = @transform_2, window_bounds = array<i64: 1, 4, 256>}, {transform_indices = @transform_3, window_bounds = array<i64: 1, 4, 256>}]} {
    %0 = tpu.iota {dimensions = array<i32: 0>} : vector<256x256xi32>
    %c0 = arith.constant 0 : index
    %c0_0 = arith.constant 0 : index
    %c0_1 = arith.constant 0 : index
    %1 = vector.load %arg2[%c0, %c0_0, %c0_1] : memref<1x1x256xi32, #tpu.memory_space<vmem>>, vector<1x1x256xi32>
    %2 = vector.shape_cast %1 : vector<1x1x256xi32> to vector<1x256xi32>
    %3 = vector.broadcast %2 : vector<1x256xi32> to vector<256x256xi32>
    %4 = arith.cmpi eq, %0, %3 : vector<256x256xi32>
    %5 = arith.extui %4 : vector<256x256xi1> to vector<256x256xi32>
    %6 = arith.sitofp %5 : vector<256x256xi32> to vector<256x256xf32>
    %c1_i32 = arith.constant 1 : i32
    %7 = tpu.dynamic_rotate %6 by %c1_i32 dim 0 : vector<256x256xf32>, i32 -> vector<256x256xf32>
    %c16_i32 = arith.constant 16 : i32
    %8 = tpu.dynamic_rotate %6 by %c16_i32 dim 0 : vector<256x256xf32>, i32 -> vector<256x256xf32>
    %c17_i32 = arith.constant 17 : i32
    %9 = tpu.dynamic_rotate %6 by %c17_i32 dim 0 : vector<256x256xf32>, i32 -> vector<256x256xf32>
    %c0_2 = arith.constant 0 : index
    %c0_3 = arith.constant 0 : index
    %c0_4 = arith.constant 0 : index
    %10 = vector.load %arg3[%c0_2, %c0_3, %c0_4] : memref<1x4x256xf32, #tpu.memory_space<vmem>>, vector<1x4x256xf32>
    %11 = vector.shape_cast %10 : vector<1x4x256xf32> to vector<4x256xf32>
    %12 = vector.extract_strided_slice %11 {offsets = [0, 0], sizes = [1, 256], strides = [1, 1]} : vector<4x256xf32> to vector<1x256xf32>
    %13 = vector.broadcast %12 : vector<1x256xf32> to vector<256x256xf32>
    %14 = arith.mulf %6, %13 : vector<256x256xf32>
    %15 = vector.extract_strided_slice %11 {offsets = [1, 0], sizes = [1, 256], strides = [1, 1]} : vector<4x256xf32> to vector<1x256xf32>
    %16 = vector.broadcast %15 : vector<1x256xf32> to vector<256x256xf32>
    %17 = arith.mulf %7, %16 : vector<256x256xf32>
    %18 = arith.addf %14, %17 : vector<256x256xf32>
    %19 = vector.extract_strided_slice %11 {offsets = [2, 0], sizes = [1, 256], strides = [1, 1]} : vector<4x256xf32> to vector<1x256xf32>
    %20 = vector.broadcast %19 : vector<1x256xf32> to vector<256x256xf32>
    %21 = arith.mulf %8, %20 : vector<256x256xf32>
    %22 = arith.addf %18, %21 : vector<256x256xf32>
    %23 = vector.extract_strided_slice %11 {offsets = [3, 0], sizes = [1, 256], strides = [1, 1]} : vector<4x256xf32> to vector<1x256xf32>
    %24 = vector.broadcast %23 : vector<1x256xf32> to vector<256x256xf32>
    %25 = arith.mulf %9, %24 : vector<256x256xf32>
    %26 = arith.addf %22, %25 : vector<256x256xf32>
    %c0_5 = arith.constant 0 : index
    %c0_6 = arith.constant 0 : index
    %c0_7 = arith.constant 0 : index
    %27 = vector.load %arg4[%c0_5, %c0_6, %c0_7] : memref<1x4x256xf32, #tpu.memory_space<vmem>>, vector<1x4x256xf32>
    %28 = vector.shape_cast %27 : vector<1x4x256xf32> to vector<4x256xf32>
    %cst = arith.constant dense<0.000000e+00> : vector<4x256xf32>
    %29 = tpu.matmul %28, %26, %cst {dimension_numbers = #tpu.dot_dimension_numbers<[1], [0], [0], [1], [0, 0, 1, 1], [], []>} : vector<4x256xf32>, vector<256x256xf32>, vector<4x256xf32> -> vector<4x256xf32>
    %c0_8 = arith.constant 0 : index
    %c0_9 = arith.constant 0 : index
    %c0_10 = arith.constant 0 : index
    %30 = vector.load %arg5[%c0_8, %c0_9, %c0_10] : memref<1x4x256xf32, #tpu.memory_space<vmem>>, vector<1x4x256xf32>
    %31 = vector.shape_cast %30 : vector<1x4x256xf32> to vector<4x256xf32>
    %32 = vector.shape_cast %29 : vector<4x256xf32> to vector<1x4x256xf32>
    tpu.vector_store %arg5[%c0_8, %c0_9, %c0_10], %32 {strides = array<i32>} : memref<1x4x256xf32, #tpu.memory_space<vmem>>, vector<1x4x256xf32>,
    return
  }
  func.func @transform_0(%arg0: i32, %arg1: i32) -> (i32, i32, i32) {
    %c0_i32 = arith.constant 0 : i32
    %c0_i32_0 = arith.constant 0 : i32
    return %arg0, %c0_i32, %arg1 : i32, i32, i32
  }
  func.func @transform_1(%arg0: i32, %arg1: i32) -> (i32, i32, i32) {
    %c0_i32 = arith.constant 0 : i32
    %c0_i32_0 = arith.constant 0 : i32
    return %arg0, %c0_i32, %arg1 : i32, i32, i32
  }
  func.func @transform_2(%arg0: i32, %arg1: i32) -> (i32, i32, i32) {
    %c0_i32 = arith.constant 0 : i32
    %c0_i32_0 = arith.constant 0 : i32
    %c0_i32_1 = arith.constant 0 : i32
    return %arg0, %c0_i32, %c0_i32_0 : i32, i32, i32
  }
  func.func @transform_3(%arg0: i32, %arg1: i32) -> (i32, i32, i32) {
    %c0_i32 = arith.constant 0 : i32
    %c0_i32_0 = arith.constant 0 : i32
    return %arg0, %c0_i32, %arg1 : i32, i32, i32
  }
}

</mosaic_0001>

<llo_original>
// kernel: tpu_custom_call.1
$region0: #{tpu_custom_call.1}
  #allocation0 [shape = 'u32[]', space=smem, size = 0x4, offset = 0x4, fixed_abs, tag = 'smem constant byte address 0x4 - core index']
  #allocation1 [shape = 'u32[144,128]{1,0:T(1,128)}', space=vmem, size = 0x12000, scoped, tag = 'internal scratch']
  %s0 = inlined_call_operand.hbm [shape: s32[2,1,256], index: 0, kind: input, shape index: {}]
  %s1 = inlined_call_operand.hbm [shape: f32[2,4,256], index: 1, kind: input, shape index: {}]
  %s2 = inlined_call_operand.hbm [shape: f32[2,4,256], index: 2, kind: input, shape index: {}]
  %s3 = inlined_call_operand.hbm [shape: f32[2,4,256], index: 3, kind: output, shape index: {}]
  %s4 = sld [smem:[#allocation0]]
  $region57: #{tpu_custom_call.1} parent=0
    _
  %s6 = ssub.s32 1, %s4
  %s7 = scalar_select 0, %s6, %s4
  $region1: #{tpu_custom_call.1} parent=0
    #allocation2 [shape = 'u8[2048]{0}', space=vmem, size = 0x800, scoped, tag = 'input window, operand 0']
    #allocation3 [shape = 's32[2]{0}', space=sflag, size = 0x8, scoped, tag = 'scoped memory for tpu_custom_call.1']
    #allocation4 [shape = 's32[2]{0}', space=sflag, size = 0x8, scoped, tag = 'scoped memory for tpu_custom_call.1']
    #allocation5 [shape = 'u8[8192]{0}', space=vmem, size = 0x2000, scoped, tag = 'input window, operand 1']
    #allocation6 [shape = 's32[2]{0}', space=sflag, size = 0x8, scoped, tag = 'scoped memory for tpu_custom_call.1']
    #allocation7 [shape = 'u8[8192]{0}', space=vmem, size = 0x2000, scoped, tag = 'input window, operand 2']
    #allocation8 [shape = 'u8[8192]{0}', space=vmem, size = 0x2000, scoped, tag = 'output window, operand 0']
    %8 = vsyncpa [#allocation3], 0
    %s9 = scalar_lea.sflag [#allocation3], 1
    %10 = vsyncpa %s9, 0
    %11 = vsyncpa [#allocation6], 0
    %s12 = scalar_lea.sflag [#allocation6], 1
    %13 = vsyncpa %s12, 0
    %14 = vsyncpa [#allocation4], 0
    %s15 = scalar_lea.sflag [#allocation4], 1
    %16 = vsyncpa %s15, 0
    loop: start=0, step=1, limit=4
    $region2: #{tpu_custom_call.1} parent=1 // loop_pre_header
      _
    $region3: #{tpu_custom_call.1} parent=1 // loop_header
      %s18 = sphi 0, %s22
      %p19 = scmp.ge.s32.totalorder %s18, 4
      %s25 = sphi 0, %s37
      %s26 = sphi 0, %s33
      %s27 = sphi 0, %s25
      %s28 = sphi 0, %s26
      %s29 = sphi 0, %s27
      %s30 = sphi 0, %s28
      %s42 = sphi 0, %s44
      %s45 = sphi 0, %s42
      %s46 = sphi 0, %s45
      %s62 = sphi 0, %s46
      %s70 = sphi 0, %s72
      %s73 = sphi 0, %s70
      %s74 = sphi 0, %s73
      %s90 = sphi 0, %s74
      %s96 = sphi 0, %s98
      %s99 = sphi 0, %s96
      %s100 = sphi 0, %s99
      %s116 = sphi 0, %s100
      %s124 = sphi 0, %s126
      %s127 = sphi 0, %s124
      %s128 = sphi 0, %s127
      %s144 = sphi 0, %s128
    $region4: #{tpu_custom_call.1} parent=1 // loop_header_branch
      %21 = sbr.rel (%p19) target = $region8
    $region5: #{tpu_custom_call.1} parent=1 // loop_body
      %s23 = ssub.s32 %s18, 1
      %s24 = ssub.s32 %s18, 2
      %s31 = sadd.s32 1, %s26
      %p32 = scmp.ge.s32.totalorder %s31, 1
      %s33 = scalar_select %p32, 0, %s31
      %s34 = sadd.s32 1, %s25
      %s35 = scalar_select %p32, %s34, %s25
      %p36 = scmp.ge.s32.totalorder %s35, 2
      %s37 = scalar_select %p36, 0, %s35
      %s38 = ssub.s32 %s25, %s37
      %s39 = ssub.s32 %s26, %s33
      %s40 = sor.u32 %s38, %s39
      %p41 = scmp.eq.s32.totalorder %s40, 0
      %s43 = sadd.s32 %s42, 1
      %s44 = scalar_select %p41, %s42, %s43
      %p47 = pneg %p41
      %p48 = scmp.eq.s32.totalorder %s18, 1
      %p49 = por %p47, %p48
      %p50 = scmp.ne.s32.totalorder %s42, %s45
      %p51 = scmp.eq.s32.totalorder %s18, 0
      %p52 = por %p50, %p51
      %p53 = scmp.ne.s32.totalorder %s42, %s45
      %p54 = scmp.eq.s32.totalorder %s23, 1
      %p55 = por %p53, %p54
      %p56 = scmp.ne.s32.totalorder %s45, %s46
      %p57 = scmp.eq.s32.totalorder %s23, 0
      %p58 = por %p56, %p57
      %p59 = scmp.ne.s32.totalorder %s45, %s46
      %p60 = scmp.eq.s32.totalorder %s24, 1
      %p61 = por %p59, %p60
      %p63 = scmp.ne.s32.totalorder %s46, %s62
      %p64 = scmp.eq.s32.totalorder %s24, 0
      %p65 = por %p63, %p64
      %s66 = ssub.s32 %s25, %s37
      %s67 = ssub.s32 %s26, %s33
      %s68 = sor.u32 %s66, %s67
      %p69 = scmp.eq.s32.totalorder %s68, 0
      %s71 = sadd.s32 %s70, 1
      %s72 = scalar_select %p69, %s70, %s71
      %p75 = pneg %p69
      %p76 = scmp.eq.s32.totalorder %s18, 1
      %p77 = por %p75, %p76
      %p78 = scmp.ne.s32.totalorder %s70, %s73
      %p79 = scmp.eq.s32.totalorder %s18, 0
      %p80 = por %p78, %p79
      %p81 = scmp.ne.s32.totalorder %s70, %s73
      %p82 = scmp.eq.s32.totalorder %s23, 1
      %p83 = por %p81, %p82
      %p84 = scmp.ne.s32.totalorder %s73, %s74
      %p85 = scmp.eq.s32.totalorder %s23, 0
      %p86 = por %p84, %p85
      %p87 = scmp.ne.s32.totalorder %s73, %s74
      %p88 = scmp.eq.s32.totalorder %s24, 1
      %p89 = por %p87, %p88
      %p91 = scmp.ne.s32.totalorder %s74, %s90
      %p92 = scmp.eq.s32.totalorder %s24, 0
      %p93 = por %p91, %p92
      %s94 = ssub.s32 %s25, %s37
      %p95 = scmp.eq.s32.totalorder %s94, 0
      %s97 = sadd.s32 %s96, 1
      %s98 = scalar_select %p95, %s96, %s97
      %p101 = pneg %p95
      %p102 = scmp.eq.s32.totalorder %s18, 1
      %p103 = por %p101, %p102
      %p104 = scmp.ne.s32.totalorder %s96, %s99
      %p105 = scmp.eq.s32.totalorder %s18, 0
      %p106 = por %p104, %p105
      %p107 = scmp.ne.s32.totalorder %s96, %s99
      %p108 = scmp.eq.s32.totalorder %s23, 1
      %p109 = por %p107, %p108
      %p110 = scmp.ne.s32.totalorder %s99, %s100
      %p111 = scmp.eq.s32.totalorder %s23, 0
      %p112 = por %p110, %p111
      %p113 = scmp.ne.s32.totalorder %s99, %s100
      %p114 = scmp.eq.s32.totalorder %s24, 1
      %p115 = por %p113, %p114
      %p117 = scmp.ne.s32.totalorder %s100, %s116
      %p118 = scmp.eq.s32.totalorder %s24, 0
      %p119 = por %p117, %p118
      %s120 = ssub.s32 %s25, %s37
      %s121 = ssub.s32 %s26, %s33
      %s122 = sor.u32 %s120, %s121
      %p123 = scmp.eq.s32.totalorder %s122, 0
      %s125 = sadd.s32 %s124, 1
      %s126 = scalar_select %p123, %s124, %s125
      %p129 = pneg %p123
      %p130 = scmp.eq.s32.totalorder %s18, 1
      %p131 = por %p129, %p130
      %p132 = scmp.ne.s32.totalorder %s124, %s127
      %p133 = scmp.eq.s32.totalorder %s18, 0
      %p134 = por %p132, %p133
      %p135 = scmp.ne.s32.totalorder %s124, %s127
      %p136 = scmp.eq.s32.totalorder %s23, 1
      %p137 = por %p135, %p136
      %p138 = scmp.ne.s32.totalorder %s127, %s128
      %p139 = scmp.eq.s32.totalorder %s23, 0
      %p140 = por %p138, %p139
      %p141 = scmp.ne.s32.totalorder %s127, %s128
      %p142 = scmp.eq.s32.totalorder %s24, 1
      %p143 = por %p141, %p142
      %p145 = scmp.ne.s32.totalorder %s128, %s144
      %p146 = scmp.eq.s32.totalorder %s24, 0
      %p147 = por %p145, %p146
      %p148 = scmp.le.s32.totalorder 1, %s18
      %p149 = scmp.lt.s32.totalorder %s18, 3
      %p150 = pnand %p148, %p149
      %p151 = pneg %p150
      // Predicated region
      $region9: #{tpu_custom_call.1} parent=5 // pred_check
        _
      $region10: #{tpu_custom_call.1} parent=5 // pred_check_branch
        %153 = sbr.rel (%p150) target = $region12
      $region11: #{tpu_custom_call.1} parent=5 // pred_region
        %s154 = ssub.s32 %s18, 1
      $region12: #{tpu_custom_call.1} parent=5 // pred_fallthru
        _
      %p155 = scmp.lt.s32.totalorder %s18, 2
      // Predicated region
      $region13: #{tpu_custom_call.1} parent=5 // pred_check
        %p156 = pneg %p155
      $region14: #{tpu_custom_call.1} parent=5 // pred_check_branch
        %158 = sbr.rel (%p156) target = $region16
      $region15: #{tpu_custom_call.1} parent=5 // pred_region
        // Predicated region
        $region17: #{tpu_custom_call.1} parent=15 // pred_check
          %p159 = pneg %p52
        $region18: #{tpu_custom_call.1} parent=15 // pred_check_branch
          %161 = sbr.rel (%p159) target = $region20
        $region19: #{tpu_custom_call.1} parent=15 // pred_region
          %s162 = sand.u32 %s42, 1
          %s163 = scalar_lea.sflag [#allocation3], %s162
          %s164 = sand.u32 %s42, 1
          %s165 = smul.addr %s164, 2
          %s166 = scalar_lea.vmem [#allocation2], %s165
          %s167 = smul.u32 2, %s26
          %s169 = ssub.s32 32, 32
          %170 = vsyncadd %s163, %s169
          %s171 = smul.addr %s25, 2
          %s172 = sadd.s32 %s167, %s171
          %s173 = smul.addr %s172, 16
          %s174 = scalar_lea.hbm %s0, %s173
          %s176 = sshll.u32 %s166, 4
          %s177 = int_to_ptr.vmem [resolvable:$true] %s176
          %179 = dma.hbm_to_vmem [thread:$0]  %s174, 32, %s177, %s163
        $region20: #{tpu_custom_call.1} parent=15 // pred_fallthru
          _
        // Predicated region
        $region21: #{tpu_custom_call.1} parent=15 // pred_check
          %p180 = pneg %p80
        $region22: #{tpu_custom_call.1} parent=15 // pred_check_branch
          %182 = sbr.rel (%p180) target = $region24
        $region23: #{tpu_custom_call.1} parent=15 // pred_region
          %s183 = sand.u32 %s18, 1
          %s184 = scalar_lea.sflag [#allocation6], %s183
          %s185 = sand.u32 %s70, 1
          %s186 = smul.addr %s185, 8
          %s187 = scalar_lea.vmem [#allocation5], %s186
          %s188 = smul.u32 2, %s26
          %s190 = ssub.s32 128, 128
          %191 = vsyncadd %s184, %s190
          %s192 = smul.addr %s25, 2
          %s193 = sadd.s32 %s188, %s192
          %s194 = smul.addr %s193, 64
          %s195 = scalar_lea.hbm %s1, %s194
          %s197 = sshll.u32 %s187, 4
          %s198 = int_to_ptr.vmem [resolvable:$true] %s197
          %200 = dma.hbm_to_vmem [thread:$0]  %s195, 128, %s198, %s184
        $region24: #{tpu_custom_call.1} parent=15 // pred_fallthru
          _
        // Predicated region
        $region25: #{tpu_custom_call.1} parent=15 // pred_check
          %p201 = pneg %p106
        $region26: #{tpu_custom_call.1} parent=15 // pred_check_branch
          %203 = sbr.rel (%p201) target = $region28
        $region27: #{tpu_custom_call.1} parent=15 // pred_region
          %s204 = sand.u32 %s18, 1
          %s205 = scalar_lea.sflag [#allocation6], %s204
          %s206 = sand.u32 %s96, 1
          %s207 = smul.addr %s206, 8
          %s208 = scalar_lea.vmem [#allocation7], %s207
          %s210 = ssub.s32 128, 128
          %211 = vsyncadd %s205, %s210
          %s212 = smul.addr %s25, 2
          %s213 = smul.addr %s212, 64
          %s214 = scalar_lea.hbm %s2, %s213
          %s216 = sshll.u32 %s208, 4
          %s217 = int_to_ptr.vmem [resolvable:$true] %s216
          %219 = dma.hbm_to_vmem [thread:$0]  %s214, 128, %s217, %s205
        $region28: #{tpu_custom_call.1} parent=15 // pred_fallthru
          _
      $region16: #{tpu_custom_call.1} parent=5 // pred_fallthru
        _
      %p220 = scmp.le.s32.totalorder 1, %s18
      %p221 = scmp.lt.s32.totalorder %s18, 3
      %p222 = pnand %p220, %p221
      %p223 = pneg %p222
      // Predicated region
      $region29: #{tpu_custom_call.1} parent=5 // pred_check
        _
      $region30: #{tpu_custom_call.1} parent=5 // pred_check_branch
        %225 = sbr.rel (%p222) target = $region32
      $region31: #{tpu_custom_call.1} parent=5 // pred_region
        %s226 = ssub.s32 %s18, 1
        %s227 = sand.u32 %s45, 1
        %s228 = scalar_lea.sflag [#allocation3], %s227
        %s229 = sand.u32 %s45, 1
        %s230 = smul.addr %s229, 2
        %s231 = scalar_lea.vmem [#allocation2], %s230
        // Predicated region
        $region33: #{tpu_custom_call.1} parent=31 // pred_check
          %p232 = pneg %p58
        $region34: #{tpu_custom_call.1} parent=31 // pred_check_branch
          %234 = sbr.rel (%p232) target = $region36
        $region35: #{tpu_custom_call.1} parent=31 // pred_region
          %235 = dma.done %s228, 32
        $region36: #{tpu_custom_call.1} parent=31 // pred_fallthru
          _
        %s236 = sand.u32 %s23, 1
        %s237 = scalar_lea.sflag [#allocation6], %s236
        %s238 = sand.u32 %s73, 1
        %s239 = smul.addr %s238, 8
        %s240 = scalar_lea.vmem [#allocation5], %s239
        // Predicated region
        $region37: #{tpu_custom_call.1} parent=31 // pred_check
          %p241 = pneg %p86
        $region38: #{tpu_custom_call.1} parent=31 // pred_check_branch
          %243 = sbr.rel (%p241) target = $region40
        $region39: #{tpu_custom_call.1} parent=31 // pred_region
          %244 = dma.done %s237, 128
        $region40: #{tpu_custom_call.1} parent=31 // pred_fallthru
          _
        %s245 = sand.u32 %s23, 1
        %s246 = scalar_lea.sflag [#allocation6], %s245
        %s247 = sand.u32 %s99, 1
        %s248 = smul.addr %s247, 8
        %s249 = scalar_lea.vmem [#allocation7], %s248
        // Predicated region
        $region41: #{tpu_custom_call.1} parent=31 // pred_check
          %p250 = pneg %p112
        $region42: #{tpu_custom_call.1} parent=31 // pred_check_branch
          %252 = sbr.rel (%p250) target = $region44
        $region43: #{tpu_custom_call.1} parent=31 // pred_region
          %253 = dma.done %s246, 128
        $region44: #{tpu_custom_call.1} parent=31 // pred_fallthru
          _
        %s254 = sand.u32 %s45, 1
        %s255 = scalar_lea.sflag [#allocation3], %s254
        %s256 = sand.u32 %s45, 1
        %s257 = smul.addr %s256, 2
        %s258 = scalar_lea.vmem [#allocation2], %s257
        %p259 = pneg %p58
        %p260 = pneg %p55
        %s261 = sand.u32 %s23, 1
        %s262 = scalar_lea.sflag [#allocation6], %s261
        %s263 = sand.u32 %s73, 1
        %s264 = smul.addr %s263, 8
        %s265 = scalar_lea.vmem [#allocation5], %s264
        %p266 = pneg %p86
        %p267 = pneg %p83
        %s268 = sand.u32 %s23, 1
        %s269 = scalar_lea.sflag [#allocation6], %s268
        %s270 = sand.u32 %s99, 1
        %s271 = smul.addr %s270, 8
        %s272 = scalar_lea.vmem [#allocation7], %s271
        %p273 = pneg %p112
        %p274 = pneg %p109
        %p275 = pneg %p140
        %p276 = pneg %p137
        %s277 = sand.u32 %s127, 1
        %s278 = scalar_lea.sflag [#allocation4], %s277
        %s279 = sand.u32 %s127, 1
        %s280 = smul.addr %s279, 8
        %s281 = scalar_lea.vmem [#allocation8], %s280
        %s282 = smul.u32 2, %s28
        %s283 = smul.u32 2, %s28
        %s284 = smul.u32 2, %s28
        %v285 = vlaneseq
        %v286 = vshrl.u32 %v285, 7
        %v287 = vadd.s32 %v286, 8
        %v288 = vadd.s32 %v286, 16
        %v289 = vadd.s32 %v286, 24
        %v290 = vadd.s32 %v286, 32
        %v291 = vadd.s32 %v286, 40
        %v292 = vadd.s32 %v286, 48
        %v293 = vadd.s32 %v286, 56
        %v294 = vadd.s32 %v286, 64
        %v295 = vadd.s32 %v286, 72
        %v296 = vadd.s32 %v286, 80
        %v297 = vadd.s32 %v286, 88
        %v298 = vadd.s32 %v286, 96
        %v299 = vadd.s32 %v286, 104
        %v300 = vadd.s32 %v286, 112
        %v301 = vadd.s32 %v286, 120
        %v302 = vadd.s32 %v286, 128
        %v303 = vadd.s32 %v286, 136
        %v304 = vadd.s32 %v286, 144
        %v305 = vadd.s32 %v286, 152
        %v306 = vadd.s32 %v286, 160
        %v307 = vadd.s32 %v286, 168
        %v308 = vadd.s32 %v286, 176
        %v309 = vadd.s32 %v286, 184
        %v310 = vadd.s32 %v286, 192
        %v311 = vadd.s32 %v286, 200
        %v312 = vadd.s32 %v286, 208
        %v313 = vadd.s32 %v286, 216
        %v314 = vadd.s32 %v286, 224
        %v315 = vadd.s32 %v286, 232
        %v316 = vadd.s32 %v286, 240
        %v317 = vadd.s32 %v286, 248
        %v318 = vld [vmem:[%s231] sm:$0x3]
        %v319 = vlaneseq
        %v320 = vshrl.u32 %v319, 7
        %v321 = vsub.s32 0, %v320
        %v322 = vrot.slane %v318, %v321
        %v323 = vlaneseq
        %v324 = vshrl.u32 %v323, 7
        %v325 = vsub.s32 1, %v324
        %v326 = vrot.slane %v318, %v325
        %vm327 = vcmp.eq.s32.totalorder %v286, %v322
        %vm328 = vcmp.eq.s32.totalorder %v286, %v326
        %vm329 = vcmp.eq.s32.totalorder %v287, %v322
        %vm330 = vcmp.eq.s32.totalorder %v287, %v326
        %vm331 = vcmp.eq.s32.totalorder %v288, %v322
        %vm332 = vcmp.eq.s32.totalorder %v288, %v326
        %vm333 = vcmp.eq.s32.totalorder %v289, %v322
        %vm334 = vcmp.eq.s32.totalorder %v289, %v326
        %vm335 = vcmp.eq.s32.totalorder %v290, %v322
        %vm336 = vcmp.eq.s32.totalorder %v290, %v326
        %vm337 = vcmp.eq.s32.totalorder %v291, %v322
        %vm338 = vcmp.eq.s32.totalorder %v291, %v326
        %vm339 = vcmp.eq.s32.totalorder %v292, %v322
        %vm340 = vcmp.eq.s32.totalorder %v292, %v326
        %vm341 = vcmp.eq.s32.totalorder %v293, %v322
        %vm342 = vcmp.eq.s32.totalorder %v293, %v326
        %vm343 = vcmp.eq.s32.totalorder %v294, %v322
        %vm344 = vcmp.eq.s32.totalorder %v294, %v326
        %vm345 = vcmp.eq.s32.totalorder %v295, %v322
        %vm346 = vcmp.eq.s32.totalorder %v295, %v326
        %vm347 = vcmp.eq.s32.totalorder %v296, %v322
        %vm348 = vcmp.eq.s32.totalorder %v296, %v326
        %vm349 = vcmp.eq.s32.totalorder %v297, %v322
        %vm350 = vcmp.eq.s32.totalorder %v297, %v326
        %vm351 = vcmp.eq.s32.totalorder %v298, %v322
        %vm352 = vcmp.eq.s32.totalorder %v298, %v326
        %vm353 = vcmp.eq.s32.totalorder %v299, %v322
        %vm354 = vcmp.eq.s32.totalorder %v299, %v326
        %vm355 = vcmp.eq.s32.totalorder %v300, %v322
        %vm356 = vcmp.eq.s32.totalorder %v300, %v326
        %vm357 = vcmp.eq.s32.totalorder %v301, %v322
        %vm358 = vcmp.eq.s32.totalorder %v301, %v326
        %vm359 = vcmp.eq.s32.totalorder %v302, %v322
        %vm360 = vcmp.eq.s32.totalorder %v302, %v326
        %vm361 = vcmp.eq.s32.totalorder %v303, %v322
        %vm362 = vcmp.eq.s32.totalorder %v303, %v326
        %vm363 = vcmp.eq.s32.totalorder %v304, %v322
        %vm364 = vcmp.eq.s32.totalorder %v304, %v326
        %vm365 = vcmp.eq.s32.totalorder %v305, %v322
        %vm366 = vcmp.eq.s32.totalorder %v305, %v326
        %vm367 = vcmp.eq.s32.totalorder %v306, %v322
        %vm368 = vcmp.eq.s32.totalorder %v306, %v326
        %vm369 = vcmp.eq.s32.totalorder %v307, %v322
        %vm370 = vcmp.eq.s32.totalorder %v307, %v326
        %vm371 = vcmp.eq.s32.totalorder %v308, %v322
        %vm372 = vcmp.eq.s32.totalorder %v308, %v326
        %vm373 = vcmp.eq.s32.totalorder %v309, %v322
        %vm374 = vcmp.eq.s32.totalorder %v309, %v326
        %vm375 = vcmp.eq.s32.totalorder %v310, %v322
        %vm376 = vcmp.eq.s32.totalorder %v310, %v326
        %vm377 = vcmp.eq.s32.totalorder %v311, %v322
        %vm378 = vcmp.eq.s32.totalorder %v311, %v326
        %vm379 = vcmp.eq.s32.totalorder %v312, %v322
        %vm380 = vcmp.eq.s32.totalorder %v312, %v326
        %vm381 = vcmp.eq.s32.totalorder %v313, %v322
        %vm382 = vcmp.eq.s32.totalorder %v313, %v326
        %vm383 = vcmp.eq.s32.totalorder %v314, %v322
        %vm384 = vcmp.eq.s32.totalorder %v314, %v326
        %vm385 = vcmp.eq.s32.totalorder %v315, %v322
        %vm386 = vcmp.eq.s32.totalorder %v315, %v326
        %vm387 = vcmp.eq.s32.totalorder %v316, %v322
        %vm388 = vcmp.eq.s32.totalorder %v316, %v326
        %vm389 = vcmp.eq.s32.totalorder %v317, %v322
        %vm390 = vcmp.eq.s32.totalorder %v317, %v326
        %v391 = vsel %vm327, 1, 0
        %v392 = vsel %vm328, 1, 0
        %v393 = vsel %vm329, 1, 0
        %v394 = vsel %vm330, 1, 0
        %v395 = vsel %vm331, 1, 0
        %v396 = vsel %vm332, 1, 0
        %v397 = vsel %vm333, 1, 0
        %v398 = vsel %vm334, 1, 0
        %v399 = vsel %vm335, 1, 0
        %v400 = vsel %vm336, 1, 0
        %v401 = vsel %vm337, 1, 0
        %v402 = vsel %vm338, 1, 0
        %v403 = vsel %vm339, 1, 0
        %v404 = vsel %vm340, 1, 0
        %v405 = vsel %vm341, 1, 0
        %v406 = vsel %vm342, 1, 0
        %v407 = vsel %vm343, 1, 0
        %v408 = vsel %vm344, 1, 0
        %v409 = vsel %vm345, 1, 0
        %v410 = vsel %vm346, 1, 0
        %v411 = vsel %vm347, 1, 0
        %v412 = vsel %vm348, 1, 0
        %v413 = vsel %vm349, 1, 0
        %v414 = vsel %vm350, 1, 0
        %v415 = vsel %vm351, 1, 0
        %v416 = vsel %vm352, 1, 0
        %v417 = vsel %vm353, 1, 0
        %v418 = vsel %vm354, 1, 0
        %v419 = vsel %vm355, 1, 0
        %v420 = vsel %vm356, 1, 0
        %v421 = vsel %vm357, 1, 0
        %v422 = vsel %vm358, 1, 0
        %v423 = vsel %vm359, 1, 0
        %v424 = vsel %vm360, 1, 0
        %v425 = vsel %vm361, 1, 0
        %v426 = vsel %vm362, 1, 0
        %v427 = vsel %vm363, 1, 0
        %v428 = vsel %vm364, 1, 0
        %v429 = vsel %vm365, 1, 0
        %v430 = vsel %vm366, 1, 0
        %v431 = vsel %vm367, 1, 0
        %v432 = vsel %vm368, 1, 0
        %v433 = vsel %vm369, 1, 0
        %v434 = vsel %vm370, 1, 0
        %v435 = vsel %vm371, 1, 0
        %v436 = vsel %vm372, 1, 0
        %v437 = vsel %vm373, 1, 0
        %v438 = vsel %vm374, 1, 0
        %v439 = vsel %vm375, 1, 0
        %v440 = vsel %vm376, 1, 0
        %v441 = vsel %vm377, 1, 0
        %v442 = vsel %vm378, 1, 0
        %v443 = vsel %vm379, 1, 0
        %v444 = vsel %vm380, 1, 0
        %v445 = vsel %vm381, 1, 0
        %v446 = vsel %vm382, 1, 0
        %v447 = vsel %vm383, 1, 0
        %v448 = vsel %vm384, 1, 0
        %v449 = vsel %vm385, 1, 0
        %v450 = vsel %vm386, 1, 0
        %v451 = vsel %vm387, 1, 0
        %v452 = vsel %vm388, 1, 0
        %v453 = vsel %vm389, 1, 0
        %v454 = vsel %vm390, 1, 0
        %v455 = vcvt.s32.f32 %v391
        %v456 = vcvt.s32.f32 %v392
        %v457 = vcvt.s32.f32 %v393
        %v458 = vcvt.s32.f32 %v394
        %v459 = vcvt.s32.f32 %v395
        %v460 = vcvt.s32.f32 %v396
        %v461 = vcvt.s32.f32 %v397
        %v462 = vcvt.s32.f32 %v398
        %v463 = vcvt.s32.f32 %v399
        %v464 = vcvt.s32.f32 %v400
        %v465 = vcvt.s32.f32 %v401
        %v466 = vcvt.s32.f32 %v402
        %v467 = vcvt.s32.f32 %v403
        %v468 = vcvt.s32.f32 %v404
        %v469 = vcvt.s32.f32 %v405
        %v470 = vcvt.s32.f32 %v406
        %v471 = vcvt.s32.f32 %v407
        %v472 = vcvt.s32.f32 %v408
        %v473 = vcvt.s32.f32 %v409
        %v474 = vcvt.s32.f32 %v410
        %v475 = vcvt.s32.f32 %v411
        %v476 = vcvt.s32.f32 %v412
        %v477 = vcvt.s32.f32 %v413
        %v478 = vcvt.s32.f32 %v414
        %v479 = vcvt.s32.f32 %v415
        %v480 = vcvt.s32.f32 %v416
        %v481 = vcvt.s32.f32 %v417
        %v482 = vcvt.s32.f32 %v418
        %v483 = vcvt.s32.f32 %v419
        %v484 = vcvt.s32.f32 %v420
        %v485 = vcvt.s32.f32 %v421
        %v486 = vcvt.s32.f32 %v422
        %v487 = vcvt.s32.f32 %v423
        %v488 = vcvt.s32.f32 %v424
        %v489 = vcvt.s32.f32 %v425
        %v490 = vcvt.s32.f32 %v426
        %v491 = vcvt.s32.f32 %v427
        %v492 = vcvt.s32.f32 %v428
        %v493 = vcvt.s32.f32 %v429
        %v494 = vcvt.s32.f32 %v430
        %v495 = vcvt.s32.f32 %v431
        %v496 = vcvt.s32.f32 %v432
        %v497 = vcvt.s32.f32 %v433
        %v498 = vcvt.s32.f32 %v434
        %v499 = vcvt.s32.f32 %v435
        %v500 = vcvt.s32.f32 %v436
        %v501 = vcvt.s32.f32 %v437
        %v502 = vcvt.s32.f32 %v438
        %v503 = vcvt.s32.f32 %v439
        %v504 = vcvt.s32.f32 %v440
        %v505 = vcvt.s32.f32 %v441
        %v506 = vcvt.s32.f32 %v442
        %v507 = vcvt.s32.f32 %v443
        %v508 = vcvt.s32.f32 %v444
        %v509 = vcvt.s32.f32 %v445
        %v510 = vcvt.s32.f32 %v446
        %v511 = vcvt.s32.f32 %v447
        %v512 = vcvt.s32.f32 %v448
        %v513 = vcvt.s32.f32 %v449
        %v514 = vcvt.s32.f32 %v450
        %v515 = vcvt.s32.f32 %v451
        %v516 = vcvt.s32.f32 %v452
        %v517 = vcvt.s32.f32 %v453
        %v518 = vcvt.s32.f32 %v454
        %v519 = vrot.slane %v455, 7
        %v520 = vrot.slane %v456, 7
        %v521 = vrot.slane %v457, 7
        %v522 = vrot.slane %v458, 7
        %v523 = vrot.slane %v459, 7
        %v524 = vrot.slane %v460, 7
        %v525 = vrot.slane %v461, 7
        %v526 = vrot.slane %v462, 7
        %v527 = vrot.slane %v463, 7
        %v528 = vrot.slane %v464, 7
        %v529 = vrot.slane %v465, 7
        %v530 = vrot.slane %v466, 7
        %v531 = vrot.slane %v467, 7
        %v532 = vrot.slane %v468, 7
        %v533 = vrot.slane %v469, 7
        %v534 = vrot.slane %v470, 7
        %v535 = vrot.slane %v471, 7
        %v536 = vrot.slane %v472, 7
        %v537 = vrot.slane %v473, 7
        %v538 = vrot.slane %v474, 7
        %v539 = vrot.slane %v475, 7
        %v540 = vrot.slane %v476, 7
        %v541 = vrot.slane %v477, 7
        %v542 = vrot.slane %v478, 7
        %v543 = vrot.slane %v479, 7
        %v544 = vrot.slane %v480, 7
        %v545 = vrot.slane %v481, 7
        %v546 = vrot.slane %v482, 7
        %v547 = vrot.slane %v483, 7
        %v548 = vrot.slane %v484, 7
        %v549 = vrot.slane %v485, 7
        %v550 = vrot.slane %v486, 7
        %v551 = vrot.slane %v487, 7
        %v552 = vrot.slane %v488, 7
        %v553 = vrot.slane %v489, 7
        %v554 = vrot.slane %v490, 7
        %v555 = vrot.slane %v491, 7
        %v556 = vrot.slane %v492, 7
        %v557 = vrot.slane %v493, 7
        %v558 = vrot.slane %v494, 7
        %v559 = vrot.slane %v495, 7
        %v560 = vrot.slane %v496, 7
        %v561 = vrot.slane %v497, 7
        %v562 = vrot.slane %v498, 7
        %v563 = vrot.slane %v499, 7
        %v564 = vrot.slane %v500, 7
        %v565 = vrot.slane %v501, 7
        %v566 = vrot.slane %v502, 7
        %v567 = vrot.slane %v503, 7
        %v568 = vrot.slane %v504, 7
        %v569 = vrot.slane %v505, 7
        %v570 = vrot.slane %v506, 7
        %v571 = vrot.slane %v507, 7
        %v572 = vrot.slane %v508, 7
        %v573 = vrot.slane %v509, 7
        %v574 = vrot.slane %v510, 7
        %v575 = vrot.slane %v511, 7
        %v576 = vrot.slane %v512, 7
        %v577 = vrot.slane %v513, 7
        %v578 = vrot.slane %v514, 7
        %v579 = vrot.slane %v515, 7
        %v580 = vrot.slane %v516, 7
        %v581 = vrot.slane %v517, 7
        %v582 = vrot.slane %v518, 7
        %vm583 = vcmp.lt.s32.totalorder %v286, 1
        %v584 = vsel %vm583, %v579, %v581
        %v585 = vsel %vm583, %v580, %v582
        %v586 = vsel %vm583, %v577, %v579
        %v587 = vsel %vm583, %v578, %v580
        %v588 = vsel %vm583, %v575, %v577
        %v589 = vsel %vm583, %v576, %v578
        %v590 = vsel %vm583, %v573, %v575
        %v591 = vsel %vm583, %v574, %v576
        %v592 = vsel %vm583, %v571, %v573
        %v593 = vsel %vm583, %v572, %v574
        %v594 = vsel %vm583, %v569, %v571
        %v595 = vsel %vm583, %v570, %v572
        %v596 = vsel %vm583, %v567, %v569
        %v597 = vsel %vm583, %v568, %v570
        %v598 = vsel %vm583, %v565, %v567
        %v599 = vsel %vm583, %v566, %v568
        %v600 = vsel %vm583, %v563, %v565
        %v601 = vsel %vm583, %v564, %v566
        %v602 = vsel %vm583, %v561, %v563
        %v603 = vsel %vm583, %v562, %v564
        %v604 = vsel %vm583, %v559, %v561
        %v605 = vsel %vm583, %v560, %v562
        %v606 = vsel %vm583, %v557, %v559
        %v607 = vsel %vm583, %v558, %v560
        %v608 = vsel %vm583, %v555, %v557
        %v609 = vsel %vm583, %v556, %v558
        %v610 = vsel %vm583, %v553, %v555
        %v611 = vsel %vm583, %v554, %v556
        %v612 = vsel %vm583, %v551, %v553
        %v613 = vsel %vm583, %v552, %v554
        %v614 = vsel %vm583, %v549, %v551
        %v615 = vsel %vm583, %v550, %v552
        %v616 = vsel %vm583, %v547, %v549
        %v617 = vsel %vm583, %v548, %v550
        %v618 = vsel %vm583, %v545, %v547
        %v619 = vsel %vm583, %v546, %v548
        %v620 = vsel %vm583, %v543, %v545
        %v621 = vsel %vm583, %v544, %v546
        %v622 = vsel %vm583, %v541, %v543
        %v623 = vsel %vm583, %v542, %v544
        %v624 = vsel %vm583, %v539, %v541
        %v625 = vsel %vm583, %v540, %v542
        %v626 = vsel %vm583, %v537, %v539
        %v627 = vsel %vm583, %v538, %v540
        %v628 = vsel %vm583, %v535, %v537
        %v629 = vsel %vm583, %v536, %v538
        %v630 = vsel %vm583, %v533, %v535
        %v631 = vsel %vm583, %v534, %v536
        %v632 = vsel %vm583, %v531, %v533
        %v633 = vsel %vm583, %v532, %v534
        %v634 = vsel %vm583, %v529, %v531
        %v635 = vsel %vm583, %v530, %v532
        %v636 = vsel %vm583, %v527, %v529
        %v637 = vsel %vm583, %v528, %v530
        %v638 = vsel %vm583, %v525, %v527
        %v639 = vsel %vm583, %v526, %v528
        %v640 = vsel %vm583, %v523, %v525
        %v641 = vsel %vm583, %v524, %v526
        %v642 = vsel %vm583, %v521, %v523
        %v643 = vsel %vm583, %v522, %v524
        %v644 = vsel %vm583, %v519, %v521
        %v645 = vsel %vm583, %v520, %v522
        %v646 = vsel %vm583, %v581, %v519
        %v647 = vsel %vm583, %v582, %v520
        %v648 = vld [vmem:[%s240] sm:$0xff]
        %v650 = vlaneseq
        %v651 = vshrl.u32 %v650, 7
        %v652 = vsub.s32 0, %v651
        %v653 = vrot.slane %v648, %v652
        %v654 = vlaneseq
        %v655 = vshrl.u32 %v654, 7
        %v656 = vsub.s32 4, %v655
        %v657 = vrot.slane %v648, %v656
        %v660 = vlaneseq
        %v661 = vshrl.u32 %v660, 7
        %v662 = vsub.s32 0, %v661
        %v663 = vrot.slane %v653, %v662
        %v664 = vlaneseq
        %v665 = vshrl.u32 %v664, 7
        %v666 = vsub.s32 0, %v665
        %v667 = vrot.slane %v657, %v666
        %v668 = vmul.f32 %v455, %v663
        %v669 = vmul.f32 %v456, %v667
        %v670 = vmul.f32 %v457, %v663
        %v671 = vmul.f32 %v458, %v667
        %v672 = vmul.f32 %v459, %v663
        %v673 = vmul.f32 %v460, %v667
        %v674 = vmul.f32 %v461, %v663
        %v675 = vmul.f32 %v462, %v667
        %v676 = vmul.f32 %v463, %v663
        %v677 = vmul.f32 %v464, %v667
        %v678 = vmul.f32 %v465, %v663
        %v679 = vmul.f32 %v466, %v667
        %v680 = vmul.f32 %v467, %v663
        %v681 = vmul.f32 %v468, %v667
        %v682 = vmul.f32 %v469, %v663
        %v683 = vmul.f32 %v470, %v667
        %v684 = vmul.f32 %v471, %v663
        %v685 = vmul.f32 %v472, %v667
        %v686 = vmul.f32 %v473, %v663
        %v687 = vmul.f32 %v474, %v667
        %v688 = vmul.f32 %v475, %v663
        %v689 = vmul.f32 %v476, %v667
        %v690 = vmul.f32 %v477, %v663
        %v691 = vmul.f32 %v478, %v667
        %v692 = vmul.f32 %v479, %v663
        %v693 = vmul.f32 %v480, %v667
        %v694 = vmul.f32 %v481, %v663
        %v695 = vmul.f32 %v482, %v667
        %v696 = vmul.f32 %v483, %v663
        %v697 = vmul.f32 %v484, %v667
        %v698 = vmul.f32 %v485, %v663
        %v699 = vmul.f32 %v486, %v667
        %v700 = vmul.f32 %v487, %v663
        %v701 = vmul.f32 %v488, %v667
        %v702 = vmul.f32 %v489, %v663
        %v703 = vmul.f32 %v490, %v667
        %v704 = vmul.f32 %v491, %v663
        %v705 = vmul.f32 %v492, %v667
        %v706 = vmul.f32 %v493, %v663
        %v707 = vmul.f32 %v494, %v667
        %v708 = vmul.f32 %v495, %v663
        %v709 = vmul.f32 %v496, %v667
        %v710 = vmul.f32 %v497, %v663
        %v711 = vmul.f32 %v498, %v667
        %v712 = vmul.f32 %v499, %v663
        %v713 = vmul.f32 %v500, %v667
        %v714 = vmul.f32 %v501, %v663
        %v715 = vmul.f32 %v502, %v667
        %v716 = vmul.f32 %v503, %v663
        %v717 = vmul.f32 %v504, %v667
        %v718 = vmul.f32 %v505, %v663
        %v719 = vmul.f32 %v506, %v667
        %v720 = vmul.f32 %v507, %v663
        %v721 = vmul.f32 %v508, %v667
        %v722 = vmul.f32 %v509, %v663
        %v723 = vmul.f32 %v510, %v667
        %v724 = vmul.f32 %v511, %v663
        %v725 = vmul.f32 %v512, %v667
        %v726 = vmul.f32 %v513, %v663
        %v727 = vmul.f32 %v514, %v667
        %v728 = vmul.f32 %v515, %v663
        %v729 = vmul.f32 %v516, %v667
        %v730 = vmul.f32 %v517, %v663
        %v731 = vmul.f32 %v518, %v667
        %v732 = vlaneseq
        %v733 = vshrl.u32 %v732, 7
        %v734 = vsub.s32 1, %v733
        %v735 = vrot.slane %v648, %v734
        %v736 = vlaneseq
        %v737 = vshrl.u32 %v736, 7
        %v738 = vsub.s32 5, %v737
        %v739 = vrot.slane %v648, %v738
        %v742 = vlaneseq
        %v743 = vshrl.u32 %v742, 7
        %v744 = vsub.s32 1, %v743
        %v745 = vrot.slane %v735, %v744
        %v746 = vlaneseq
        %v747 = vshrl.u32 %v746, 7
        %v748 = vsub.s32 1, %v747
        %v749 = vrot.slane %v739, %v748
        %v750 = vmul.f32 %v646, %v745
        %v751 = vmul.f32 %v647, %v749
        %v752 = vmul.f32 %v644, %v745
        %v753 = vmul.f32 %v645, %v749
        %v754 = vmul.f32 %v642, %v745
        %v755 = vmul.f32 %v643, %v749
        %v756 = vmul.f32 %v640, %v745
        %v757 = vmul.f32 %v641, %v749
        %v758 = vmul.f32 %v638, %v745
        %v759 = vmul.f32 %v639, %v749
        %v760 = vmul.f32 %v636, %v745
        %v761 = vmul.f32 %v637, %v749
        %v762 = vmul.f32 %v634, %v745
        %v763 = vmul.f32 %v635, %v749
        %v764 = vmul.f32 %v632, %v745
        %v765 = vmul.f32 %v633, %v749
        %v766 = vmul.f32 %v630, %v745
        %v767 = vmul.f32 %v631, %v749
        %v768 = vmul.f32 %v628, %v745
        %v769 = vmul.f32 %v629, %v749
        %v770 = vmul.f32 %v626, %v745
        %v771 = vmul.f32 %v627, %v749
        %v772 = vmul.f32 %v624, %v745
        %v773 = vmul.f32 %v625, %v749
        %v774 = vmul.f32 %v622, %v745
        %v775 = vmul.f32 %v623, %v749
        %v776 = vmul.f32 %v620, %v745
        %v777 = vmul.f32 %v621, %v749
        %v778 = vmul.f32 %v618, %v745
        %v779 = vmul.f32 %v619, %v749
        %v780 = vmul.f32 %v616, %v745
        %v781 = vmul.f32 %v617, %v749
        %v782 = vmul.f32 %v614, %v745
        %v783 = vmul.f32 %v615, %v749
        %v784 = vmul.f32 %v612, %v745
        %v785 = vmul.f32 %v613, %v749
        %v786 = vmul.f32 %v610, %v745
        %v787 = vmul.f32 %v611, %v749
        %v788 = vmul.f32 %v608, %v745
        %v789 = vmul.f32 %v609, %v749
        %v790 = vmul.f32 %v606, %v745
        %v791 = vmul.f32 %v607, %v749
        %v792 = vmul.f32 %v604, %v745
        %v793 = vmul.f32 %v605, %v749
        %v794 = vmul.f32 %v602, %v745
        %v795 = vmul.f32 %v603, %v749
        %v796 = vmul.f32 %v600, %v745
        %v797 = vmul.f32 %v601, %v749
        %v798 = vmul.f32 %v598, %v745
        %v799 = vmul.f32 %v599, %v749
        %v800 = vmul.f32 %v596, %v745
        %v801 = vmul.f32 %v597, %v749
        %v802 = vmul.f32 %v594, %v745
        %v803 = vmul.f32 %v595, %v749
        %v804 = vmul.f32 %v592, %v745
        %v805 = vmul.f32 %v593, %v749
        %v806 = vmul.f32 %v590, %v745
        %v807 = vmul.f32 %v591, %v749
        %v808 = vmul.f32 %v588, %v745
        %v809 = vmul.f32 %v589, %v749
        %v810 = vmul.f32 %v586, %v745
        %v811 = vmul.f32 %v587, %v749
        %v812 = vmul.f32 %v584, %v745
        %v813 = vmul.f32 %v585, %v749
        %v814 = vadd.f32 %v668, %v750
        %v815 = vadd.f32 %v669, %v751
        %v816 = vadd.f32 %v670, %v752
        %v817 = vadd.f32 %v671, %v753
        %v818 = vadd.f32 %v672, %v754
        %v819 = vadd.f32 %v673, %v755
        %v820 = vadd.f32 %v674, %v756
        %v821 = vadd.f32 %v675, %v757
        %v822 = vadd.f32 %v676, %v758
        %v823 = vadd.f32 %v677, %v759
        %v824 = vadd.f32 %v678, %v760
        %v825 = vadd.f32 %v679, %v761
        %v826 = vadd.f32 %v680, %v762
        %v827 = vadd.f32 %v681, %v763
        %v828 = vadd.f32 %v682, %v764
        %v829 = vadd.f32 %v683, %v765
        %v830 = vadd.f32 %v684, %v766
        %v831 = vadd.f32 %v685, %v767
        %v832 = vadd.f32 %v686, %v768
        %v833 = vadd.f32 %v687, %v769
        %v834 = vadd.f32 %v688, %v770
        %v835 = vadd.f32 %v689, %v771
        %v836 = vadd.f32 %v690, %v772
        %v837 = vadd.f32 %v691, %v773
        %v838 = vadd.f32 %v692, %v774
        %v839 = vadd.f32 %v693, %v775
        %v840 = vadd.f32 %v694, %v776
        %v841 = vadd.f32 %v695, %v777
        %v842 = vadd.f32 %v696, %v778
        %v843 = vadd.f32 %v697, %v779
        %v844 = vadd.f32 %v698, %v780
        %v845 = vadd.f32 %v699, %v781
        %v846 = vadd.f32 %v700, %v782
        %v847 = vadd.f32 %v701, %v783
        %v848 = vadd.f32 %v702, %v784
        %v849 = vadd.f32 %v703, %v785
        %v850 = vadd.f32 %v704, %v786
        %v851 = vadd.f32 %v705, %v787
        %v852 = vadd.f32 %v706, %v788
        %v853 = vadd.f32 %v707, %v789
        %v854 = vadd.f32 %v708, %v790
        %v855 = vadd.f32 %v709, %v791
        %v856 = vadd.f32 %v710, %v792
        %v857 = vadd.f32 %v711, %v793
        %v858 = vadd.f32 %v712, %v794
        %v859 = vadd.f32 %v713, %v795
        %v860 = vadd.f32 %v714, %v796
        %v861 = vadd.f32 %v715, %v797
        %v862 = vadd.f32 %v716, %v798
        %v863 = vadd.f32 %v717, %v799
        %v864 = vadd.f32 %v718, %v800
        %v865 = vadd.f32 %v719, %v801
        %v866 = vadd.f32 %v720, %v802
        %v867 = vadd.f32 %v721, %v803
        %v868 = vadd.f32 %v722, %v804
        %v869 = vadd.f32 %v723, %v805
        %v870 = vadd.f32 %v724, %v806
        %v871 = vadd.f32 %v725, %v807
        %v872 = vadd.f32 %v726, %v808
        %v873 = vadd.f32 %v727, %v809
        %v874 = vadd.f32 %v728, %v810
        %v875 = vadd.f32 %v729, %v811
        %v876 = vadd.f32 %v730, %v812
        %v877 = vadd.f32 %v731, %v813
        %v878 = vlaneseq
        %v879 = vshrl.u32 %v878, 7
        %v880 = vsub.s32 2, %v879
        %v881 = vrot.slane %v648, %v880
        %v882 = vlaneseq
        %v883 = vshrl.u32 %v882, 7
        %v884 = vsub.s32 6, %v883
        %v885 = vrot.slane %v648, %v884
        %v888 = vlaneseq
        %v889 = vshrl.u32 %v888, 7
        %v890 = vsub.s32 2, %v889
        %v891 = vrot.slane %v881, %v890
        %v892 = vlaneseq
        %v893 = vshrl.u32 %v892, 7
        %v894 = vsub.s32 2, %v893
        %v895 = vrot.slane %v885, %v894
        %v896 = vmul.f32 %v515, %v891
        %v897 = vmul.f32 %v516, %v895
        %v898 = vmul.f32 %v517, %v891
        %v899 = vmul.f32 %v518, %v895
        %v900 = vmul.f32 %v455, %v891
        %v901 = vmul.f32 %v456, %v895
        %v902 = vmul.f32 %v457, %v891
        %v903 = vmul.f32 %v458, %v895
        %v904 = vmul.f32 %v459, %v891
        %v905 = vmul.f32 %v460, %v895
        %v906 = vmul.f32 %v461, %v891
        %v907 = vmul.f32 %v462, %v895
        %v908 = vmul.f32 %v463, %v891
        %v909 = vmul.f32 %v464, %v895
        %v910 = vmul.f32 %v465, %v891
        %v911 = vmul.f32 %v466, %v895
        %v912 = vmul.f32 %v467, %v891
        %v913 = vmul.f32 %v468, %v895
        %v914 = vmul.f32 %v469, %v891
        %v915 = vmul.f32 %v470, %v895
        %v916 = vmul.f32 %v471, %v891
        %v917 = vmul.f32 %v472, %v895
        %v918 = vmul.f32 %v473, %v891
        %v919 = vmul.f32 %v474, %v895
        %v920 = vmul.f32 %v475, %v891
        %v921 = vmul.f32 %v476, %v895
        %v922 = vmul.f32 %v477, %v891
        %v923 = vmul.f32 %v478, %v895
        %v924 = vmul.f32 %v479, %v891
        %v925 = vmul.f32 %v480, %v895
        %v926 = vmul.f32 %v481, %v891
        %v927 = vmul.f32 %v482, %v895
        %v928 = vmul.f32 %v483, %v891
        %v929 = vmul.f32 %v484, %v895
        %v930 = vmul.f32 %v485, %v891
        %v931 = vmul.f32 %v486, %v895
        %v932 = vmul.f32 %v487, %v891
        %v933 = vmul.f32 %v488, %v895
        %v934 = vmul.f32 %v489, %v891
        %v935 = vmul.f32 %v490, %v895
        %v936 = vmul.f32 %v491, %v891
        %v937 = vmul.f32 %v492, %v895
        %v938 = vmul.f32 %v493, %v891
        %v939 = vmul.f32 %v494, %v895
        %v940 = vmul.f32 %v495, %v891
        %v941 = vmul.f32 %v496, %v895
        %v942 = vmul.f32 %v497, %v891
        %v943 = vmul.f32 %v498, %v895
        %v944 = vmul.f32 %v499, %v891
        %v945 = vmul.f32 %v500, %v895
        %v946 = vmul.f32 %v501, %v891
        %v947 = vmul.f32 %v502, %v895
        %v948 = vmul.f32 %v503, %v891
        %v949 = vmul.f32 %v504, %v895
        %v950 = vmul.f32 %v505, %v891
        %v951 = vmul.f32 %v506, %v895
        %v952 = vmul.f32 %v507, %v891
        %v953 = vmul.f32 %v508, %v895
        %v954 = vmul.f32 %v509, %v891
        %v955 = vmul.f32 %v510, %v895
        %v956 = vmul.f32 %v511, %v891
        %v957 = vmul.f32 %v512, %v895
        %v958 = vmul.f32 %v513, %v891
        %v959 = vmul.f32 %v514, %v895
        %v960 = vadd.f32 %v814, %v896
        %v961 = vadd.f32 %v815, %v897
        %v962 = vadd.f32 %v816, %v898
        %v963 = vadd.f32 %v817, %v899
        %v964 = vadd.f32 %v818, %v900
        %v965 = vadd.f32 %v819, %v901
        %v966 = vadd.f32 %v820, %v902
        %v967 = vadd.f32 %v821, %v903
        %v968 = vadd.f32 %v822, %v904
        %v969 = vadd.f32 %v823, %v905
        %v970 = vadd.f32 %v824, %v906
        %v971 = vadd.f32 %v825, %v907
        %v972 = vadd.f32 %v826, %v908
        %v973 = vadd.f32 %v827, %v909
        %v974 = vadd.f32 %v828, %v910
        %v975 = vadd.f32 %v829, %v911
        %v976 = vadd.f32 %v830, %v912
        %v977 = vadd.f32 %v831, %v913
        %v978 = vadd.f32 %v832, %v914
        %v979 = vadd.f32 %v833, %v915
        %v980 = vadd.f32 %v834, %v916
        %v981 = vadd.f32 %v835, %v917
        %v982 = vadd.f32 %v836, %v918
        %v983 = vadd.f32 %v837, %v919
        %v984 = vadd.f32 %v838, %v920
        %v985 = vadd.f32 %v839, %v921
        %v986 = vadd.f32 %v840, %v922
        %v987 = vadd.f32 %v841, %v923
        %v988 = vadd.f32 %v842, %v924
        %v989 = vadd.f32 %v843, %v925
        %v990 = vadd.f32 %v844, %v926
        %v991 = vadd.f32 %v845, %v927
        %v992 = vadd.f32 %v846, %v928
        %v993 = vadd.f32 %v847, %v929
        %v994 = vadd.f32 %v848, %v930
        %v995 = vadd.f32 %v849, %v931
        %v996 = vadd.f32 %v850, %v932
        %v997 = vadd.f32 %v851, %v933
        %v998 = vadd.f32 %v852, %v934
        %v999 = vadd.f32 %v853, %v935
        %v1000 = vadd.f32 %v854, %v936
        %v1001 = vadd.f32 %v855, %v937
        %v1002 = vadd.f32 %v856, %v938
        %v1003 = vadd.f32 %v857, %v939
        %v1004 = vadd.f32 %v858, %v940
        %v1005 = vadd.f32 %v859, %v941
        %v1006 = vadd.f32 %v860, %v942
        %v1007 = vadd.f32 %v861, %v943
        %v1008 = vadd.f32 %v862, %v944
        %v1009 = vadd.f32 %v863, %v945
        %v1010 = vadd.f32 %v864, %v946
        %v1011 = vadd.f32 %v865, %v947
        %v1012 = vadd.f32 %v866, %v948
        %v1013 = vadd.f32 %v867, %v949
        %v1014 = vadd.f32 %v868, %v950
        %v1015 = vadd.f32 %v869, %v951
        %v1016 = vadd.f32 %v870, %v952
        %v1017 = vadd.f32 %v871, %v953
        %v1018 = vadd.f32 %v872, %v954
        %v1019 = vadd.f32 %v873, %v955
        %v1020 = vadd.f32 %v874, %v956
        %v1021 = vadd.f32 %v875, %v957
        %v1022 = vadd.f32 %v876, %v958
        %v1023 = vadd.f32 %v877, %v959
        %v1024 = vlaneseq
        %v1025 = vshrl.u32 %v1024, 7
        %v1026 = vsub.s32 3, %v1025
        %v1027 = vrot.slane %v648, %v1026
        %v1028 = vlaneseq
        %v1029 = vshrl.u32 %v1028, 7
        %v1030 = vsub.s32 7, %v1029
        %v1031 = vrot.slane %v648, %v1030
        %v1034 = vlaneseq
        %v1035 = vshrl.u32 %v1034, 7
        %v1036 = vsub.s32 3, %v1035
        %v1037 = vrot.slane %v1027, %v1036
        %v1038 = vlaneseq
        %v1039 = vshrl.u32 %v1038, 7
        %v1040 = vsub.s32 3, %v1039
        %v1041 = vrot.slane %v1031, %v1040
        %v1042 = vmul.f32 %v586, %v1037
        %v1043 = vmul.f32 %v587, %v1041
        %v1044 = vmul.f32 %v584, %v1037
        %v1045 = vmul.f32 %v585, %v1041
        %v1046 = vmul.f32 %v646, %v1037
        %v1047 = vmul.f32 %v647, %v1041
        %v1048 = vmul.f32 %v644, %v1037
        %v1049 = vmul.f32 %v645, %v1041
        %v1050 = vmul.f32 %v642, %v1037
        %v1051 = vmul.f32 %v643, %v1041
        %v1052 = vmul.f32 %v640, %v1037
        %v1053 = vmul.f32 %v641, %v1041
        %v1054 = vmul.f32 %v638, %v1037
        %v1055 = vmul.f32 %v639, %v1041
        %v1056 = vmul.f32 %v636, %v1037
        %v1057 = vmul.f32 %v637, %v1041
        %v1058 = vmul.f32 %v634, %v1037
        %v1059 = vmul.f32 %v635, %v1041
        %v1060 = vmul.f32 %v632, %v1037
        %v1061 = vmul.f32 %v633, %v1041
        %v1062 = vmul.f32 %v630, %v1037
        %v1063 = vmul.f32 %v631, %v1041
        %v1064 = vmul.f32 %v628, %v1037
        %v1065 = vmul.f32 %v629, %v1041
        %v1066 = vmul.f32 %v626, %v1037
        %v1067 = vmul.f32 %v627, %v1041
        %v1068 = vmul.f32 %v624, %v1037
        %v1069 = vmul.f32 %v625, %v1041
        %v1070 = vmul.f32 %v622, %v1037
        %v1071 = vmul.f32 %v623, %v1041
        %v1072 = vmul.f32 %v620, %v1037
        %v1073 = vmul.f32 %v621, %v1041
        %v1074 = vmul.f32 %v618, %v1037
        %v1075 = vmul.f32 %v619, %v1041
        %v1076 = vmul.f32 %v616, %v1037
        %v1077 = vmul.f32 %v617, %v1041
        %v1078 = vmul.f32 %v614, %v1037
        %v1079 = vmul.f32 %v615, %v1041
        %v1080 = vmul.f32 %v612, %v1037
        %v1081 = vmul.f32 %v613, %v1041
        %v1082 = vmul.f32 %v610, %v1037
        %v1083 = vmul.f32 %v611, %v1041
        %v1084 = vmul.f32 %v608, %v1037
        %v1085 = vmul.f32 %v609, %v1041
        %v1086 = vmul.f32 %v606, %v1037
        %v1087 = vmul.f32 %v607, %v1041
        %v1088 = vmul.f32 %v604, %v1037
        %v1089 = vmul.f32 %v605, %v1041
        %v1090 = vmul.f32 %v602, %v1037
        %v1091 = vmul.f32 %v603, %v1041
        %v1092 = vmul.f32 %v600, %v1037
        %v1093 = vmul.f32 %v601, %v1041
        %v1094 = vmul.f32 %v598, %v1037
        %v1095 = vmul.f32 %v599, %v1041
        %v1096 = vmul.f32 %v596, %v1037
        %v1097 = vmul.f32 %v597, %v1041
        %v1098 = vmul.f32 %v594, %v1037
        %v1099 = vmul.f32 %v595, %v1041
        %v1100 = vmul.f32 %v592, %v1037
        %v1101 = vmul.f32 %v593, %v1041
        %v1102 = vmul.f32 %v590, %v1037
        %v1103 = vmul.f32 %v591, %v1041
        %v1104 = vmul.f32 %v588, %v1037
        %v1105 = vmul.f32 %v589, %v1041
        %v1106 = vadd.f32 %v960, %v1042
        %v1107 = vadd.f32 %v961, %v1043
        %v1108 = vadd.f32 %v962, %v1044
        %v1109 = vadd.f32 %v963, %v1045
        %v1110 = vadd.f32 %v964, %v1046
        %v1111 = vadd.f32 %v965, %v1047
        %v1112 = vadd.f32 %v966, %v1048
        %v1113 = vadd.f32 %v967, %v1049
        %v1114 = vadd.f32 %v968, %v1050
        %v1115 = vadd.f32 %v969, %v1051
        %v1116 = vadd.f32 %v970, %v1052
        %v1117 = vadd.f32 %v971, %v1053
        %v1118 = vadd.f32 %v972, %v1054
        %v1119 = vadd.f32 %v973, %v1055
        %v1120 = vadd.f32 %v974, %v1056
        %v1121 = vadd.f32 %v975, %v1057
        %v1122 = vadd.f32 %v976, %v1058
        %v1123 = vadd.f32 %v977, %v1059
        %v1124 = vadd.f32 %v978, %v1060
        %v1125 = vadd.f32 %v979, %v1061
        %v1126 = vadd.f32 %v980, %v1062
        %v1127 = vadd.f32 %v981, %v1063
        %v1128 = vadd.f32 %v982, %v1064
        %v1129 = vadd.f32 %v983, %v1065
        %v1130 = vadd.f32 %v984, %v1066
        %v1131 = vadd.f32 %v985, %v1067
        %v1132 = vadd.f32 %v986, %v1068
        %v1133 = vadd.f32 %v987, %v1069
        %v1134 = vadd.f32 %v988, %v1070
        %v1135 = vadd.f32 %v989, %v1071
        %v1136 = vadd.f32 %v990, %v1072
        %v1137 = vadd.f32 %v991, %v1073
        %v1138 = vadd.f32 %v992, %v1074
        %v1139 = vadd.f32 %v993, %v1075
        %v1140 = vadd.f32 %v994, %v1076
        %v1141 = vadd.f32 %v995, %v1077
        %v1142 = vadd.f32 %v996, %v1078
        %v1143 = vadd.f32 %v997, %v1079
        %v1144 = vadd.f32 %v998, %v1080
        %v1145 = vadd.f32 %v999, %v1081
        %v1146 = vadd.f32 %v1000, %v1082
        %v1147 = vadd.f32 %v1001, %v1083
        %v1148 = vadd.f32 %v1002, %v1084
        %v1149 = vadd.f32 %v1003, %v1085
        %v1150 = vadd.f32 %v1004, %v1086
        %v1151 = vadd.f32 %v1005, %v1087
        %v1152 = vadd.f32 %v1006, %v1088
        %v1153 = vadd.f32 %v1007, %v1089
        %v1154 = vadd.f32 %v1008, %v1090
        %v1155 = vadd.f32 %v1009, %v1091
        %v1156 = vadd.f32 %v1010, %v1092
        %v1157 = vadd.f32 %v1011, %v1093
        %v1158 = vadd.f32 %v1012, %v1094
        %v1159 = vadd.f32 %v1013, %v1095
        %v1160 = vadd.f32 %v1014, %v1096
        %v1161 = vadd.f32 %v1015, %v1097
        %v1162 = vadd.f32 %v1016, %v1098
        %v1163 = vadd.f32 %v1017, %v1099
        %v1164 = vadd.f32 %v1018, %v1100
        %v1165 = vadd.f32 %v1019, %v1101
        %v1166 = vadd.f32 %v1020, %v1102
        %v1167 = vadd.f32 %v1021, %v1103
        %v1168 = vadd.f32 %v1022, %v1104
        %v1169 = vadd.f32 %v1023, %v1105
        %v1170 = vld [vmem:[%s249] sm:$0xff]
        %v1172 = vcombine.high %v1170, %v1170
        %1174 = vmatprep.subr.mxu0 %v1107
        %1175 = vmatpush1.msra.mxu0 %v1106
        %1176 = vmatprep.subr.mxu0 %v1109
        %1177 = vmatpush1.msra.mxu0 %v1108
        %1178 = vmatprep.subr.mxu0 %v1111
        %1179 = vmatpush1.msra.mxu0 %v1110
        %1180 = vmatprep.subr.mxu0 %v1113
        %1181 = vmatpush1.msra.mxu0 %v1112
        %1182 = vmatprep.subr.mxu0 %v1115
        %1183 = vmatpush1.msra.mxu0 %v1114
        %1184 = vmatprep.subr.mxu0 %v1117
        %1185 = vmatpush1.msra.mxu0 %v1116
        %1186 = vmatprep.subr.mxu0 %v1119
        %1187 = vmatpush1.msra.mxu0 %v1118
        %1188 = vmatprep.subr.mxu0 %v1121
        %1189 = vmatpush1.msra.mxu0 %v1120
        %1190 = vmatprep.subr.mxu0 %v1123
        %1191 = vmatpush1.msra.mxu0 %v1122
        %1192 = vmatprep.subr.mxu0 %v1125
        %1193 = vmatpush1.msra.mxu0 %v1124
        %1194 = vmatprep.subr.mxu0 %v1127
        %1195 = vmatpush1.msra.mxu0 %v1126
        %1196 = vmatprep.subr.mxu0 %v1129
        %1197 = vmatpush1.msra.mxu0 %v1128
        %1198 = vmatprep.subr.mxu0 %v1131
        %1199 = vmatpush1.msra.mxu0 %v1130
        %1200 = vmatprep.subr.mxu0 %v1133
        %1201 = vmatpush1.msra.mxu0 %v1132
        %1202 = vmatprep.subr.mxu0 %v1135
        %1203 = vmatpush1.msra.mxu0 %v1134
        %1204 = vmatprep.subr.mxu0 %v1137
        %1205 = vmatpush1.msra.mxu0 %v1136
        %1206 = vmatprep.subr.mxu0 %v1139
        %1207 = vmatpush1.msra.mxu0 %v1138
        %1208 = vmatprep.subr.mxu0 %v1141
        %1209 = vmatpush1.msra.mxu0 %v1140
        %1210 = vmatprep.subr.mxu0 %v1143
        %1211 = vmatpush1.msra.mxu0 %v1142
        %1212 = vmatprep.subr.mxu0 %v1145
        %1213 = vmatpush1.msra.mxu0 %v1144
        %1214 = vmatprep.subr.mxu0 %v1147
        %1215 = vmatpush1.msra.mxu0 %v1146
        %1216 = vmatprep.subr.mxu0 %v1149
        %1217 = vmatpush1.msra.mxu0 %v1148
        %1218 = vmatprep.subr.mxu0 %v1151
        %1219 = vmatpush1.msra.mxu0 %v1150
        %1220 = vmatprep.subr.mxu0 %v1153
        %1221 = vmatpush1.msra.mxu0 %v1152
        %1222 = vmatprep.subr.mxu0 %v1155
        %1223 = vmatpush1.msra.mxu0 %v1154
        %1224 = vmatprep.subr.mxu0 %v1157
        %1225 = vmatpush1.msra.mxu0 %v1156
        %1226 = vmatprep.subr.mxu0 %v1159
        %1227 = vmatpush1.msra.mxu0 %v1158
        %1228 = vmatprep.subr.mxu0 %v1161
        %1229 = vmatpush1.msra.mxu0 %v1160
        %1230 = vmatprep.subr.mxu0 %v1163
        %1231 = vmatpush1.msra.mxu0 %v1162
        %1232 = vmatprep.subr.mxu0 %v1165
        %1233 = vmatpush1.msra.mxu0 %v1164
        %1234 = vmatprep.subr.mxu0 %v1167
        %1235 = vmatpush1.msra.mxu0 %v1166
        %1236 = vmatprep.subr.mxu0 %v1169
        %1237 = vmatpush1.msra.mxu0 %v1168
        %1238 = vmatprep.mubr.f32.mxu0 %v1172
        %1239 = vmatmul.mubr.f32.gmra.mrb[0].mxu0 %v1170
        %v1240 = vpop.f32.mrb[0].mxu0
        %v1241 = vadd.f32 0.0, %v1240
        %v1242 = vpop.f32.mrb[0].mxu0
        %v1243 = vadd.f32 0.0, %v1242
        %1244 = vdwg.mxu0
        %v1247 = vcombine.low %v1241, %v1243
        %1249 = vst [vmem:[%s281] sm:$0xff] %v1247
        %s1250 = sand.u32 %s127, 1
        %s1251 = scalar_lea.sflag [#allocation4], %s1250
        %s1252 = sand.u32 %s127, 1
        %s1253 = smul.addr %s1252, 8
        %s1254 = scalar_lea.vmem [#allocation8], %s1253
        // Predicated region
        $region45: #{tpu_custom_call.1} parent=31 // pred_check
          %p1255 = pneg %p137
        $region46: #{tpu_custom_call.1} parent=31 // pred_check_branch
          %1257 = sbr.rel (%p1255) target = $region48
        $region47: #{tpu_custom_call.1} parent=31 // pred_region
          %s1258 = smul.u32 2, %s28
          %s1260 = ssub.s32 128, 128
          %1261 = vsyncadd %s1251, %s1260
          %s1262 = smul.addr %s27, 2
          %s1263 = sadd.s32 %s1258, %s1262
          %s1264 = smul.addr %s1263, 64
          %s1265 = scalar_lea.hbm %s3, %s1264
          %s1267 = sshll.u32 %s1254, 4
          %s1268 = int_to_ptr.vmem [resolvable:$true] %s1267
          %1270 = dma.vmem_to_hbm [thread:$0]  %s1268, 128, %s1265, %s1251
        $region48: #{tpu_custom_call.1} parent=31 // pred_fallthru
          _
      $region32: #{tpu_custom_call.1} parent=5 // pred_fallthru
        _
      %p1271 = scmp.le.s32.totalorder 2, %s18
      // Predicated region
      $region49: #{tpu_custom_call.1} parent=5 // pred_check
        %p1272 = pneg %p1271
      $region50: #{tpu_custom_call.1} parent=5 // pred_check_branch
        %1274 = sbr.rel (%p1272) target = $region52
      $region51: #{tpu_custom_call.1} parent=5 // pred_region
        %s1275 = ssub.s32 %s18, 2
        // Predicated region
        $region53: #{tpu_custom_call.1} parent=51 // pred_check
          %p1276 = pneg %p143
        $region54: #{tpu_custom_call.1} parent=51 // pred_check_branch
          %1278 = sbr.rel (%p1276) target = $region56
        $region55: #{tpu_custom_call.1} parent=51 // pred_region
          %s1279 = sand.u32 %s128, 1
          %s1280 = scalar_lea.sflag [#allocation4], %s1279
          %s1281 = sand.u32 %s128, 1
          %s1282 = smul.addr %s1281, 8
          %s1283 = scalar_lea.vmem [#allocation8], %s1282
          %1284 = dma.done %s1280, 128
        $region56: #{tpu_custom_call.1} parent=51 // pred_fallthru
          _
      $region52: #{tpu_custom_call.1} parent=5 // pred_fallthru
        _
    $region6: #{tpu_custom_call.1} parent=1 // loop_footer
      %s22 = sadd.s32 1, %s18
    $region7: #{tpu_custom_call.1} parent=1 // loop_footer_branch
      %17 = sbr.rel target = $region3
    $region8: #{tpu_custom_call.1} parent=1 // loop_exit
      _
    %1285 = vsyncpa [#allocation3], 1
    %s1286 = scalar_lea.sflag [#allocation3], 1
    %1287 = vsyncpa %s1286, 1
    %1288 = vsyncpa [#allocation6], 1
    %s1289 = scalar_lea.sflag [#allocation6], 1
    %1290 = vsyncpa %s1289, 1
    %1291 = vsyncpa [#allocation4], 1
    %s1292 = scalar_lea.sflag [#allocation4], 1
    %1293 = vsyncpa %s1292, 1

</llo_original>
